<compile_context>
chip_gen: v5e
topology: v5e:2x2
jax: 0.10.0
libtpu: 0.0.40
codegen_flags: <defaults>
</compile_context>

<pallas_src>
import jax
import jax.numpy as jnp
from jax.experimental import pallas as pl
from jax.experimental.pallas import tpu as pltpu


NEG_SLOPE = 0.01  # F.leaky_relu / nn.LeakyReLU default


def _leaky_relu(x):
    return jnp.where(x > 0, x, NEG_SLOPE * x)


def _round_up(x, m):
    return ((x + m - 1) // m) * m


# ---------------------------------------------------------------------------
# Kernel: y[r, l] = x[r, l] * mu[r] + sigma[r]   (pure VPU FMA, mem-bound)
# ---------------------------------------------------------------------------
def film_kernel(x_ref, mu_ref, sigma_ref, o_ref):
    # x_ref: (TR, TL), mu_ref/sigma_ref: (TR, 1) -> broadcast across lanes.
    o_ref[...] = (x_ref[...] * mu_ref[...] + sigma_ref[...]).astype(o_ref.dtype)


# ---------------------------------------------------------------------------
# Wrapper: MLP in plain JAX (tiny matmuls), modulation in the Pallas kernel.
# ---------------------------------------------------------------------------
def film_layer(x, lam, w1, b1, w2, b2, *, tile_rows=256, tile_lanes=512):
    """x: (N, C, H, W); lam: (N, in_channels); weights shaped for nn.Linear."""
    N, C, H, W = x.shape
    R, HW = N * C, H * W

    # --- FiLM MLP: Linear -> LeakyReLU -> Linear -> split -> LeakyReLU -----
    # These matmuls are a few hundred FLOPs; keep them out of the kernel so
    # the MXU / VMEM footprint is not wasted on padded 128/256-wide tiles.
    h = _leaky_relu(lam.astype(jnp.float32) @ w1 + b1)
    out = h @ w2 + b2
    mu = _leaky_relu(out[:, :C]).reshape(R, 1).astype(x.dtype)
    sigma = _leaky_relu(out[:, C:]).reshape(R, 1).astype(x.dtype)

    # --- Flatten to (rows = N*C, lanes = H*W) and pad to tile alignment ----
    x2 = x.reshape(R, HW)
    TR = min(tile_rows, _round_up(R, 8))       # sublane-aligned row tile
    TL = min(tile_lanes, _round_up(HW, 128))   # lane-aligned spatial tile
    Rp = _round_up(R, TR)
    Lp = _round_up(HW, TL)
    if (Rp, Lp) != (R, HW):
        x2 = jnp.pad(x2, ((0, Rp - R), (0, Lp - HW)))
    if Rp != R:
        mu = jnp.pad(mu, ((0, Rp - R), (0, 0)))
        sigma = jnp.pad(sigma, ((0, Rp - R), (0, 0)))

    grid = (Rp // TR, Lp // TL)
    out2 = pl.pallas_call(
        film_kernel,
        out_shape=jax.ShapeDtypeStruct((Rp, Lp), x.dtype),
        grid=grid,
        in_specs=[
            pl.BlockSpec((TR, TL), lambda i, j: (i, j)),   # x tile
            pl.BlockSpec((TR, 1), lambda i, j: (i, 0)),    # mu column
            pl.BlockSpec((TR, 1), lambda i, j: (i, 0)),    # sigma column
        ],
        out_specs=pl.BlockSpec((TR, TL), lambda i, j: (i, j)),
        compiler_params=pltpu.CompilerParams(
            dimension_semantics=("parallel", "parallel")),
    )(x2, mu, sigma)

    return out2[:R, :HW].reshape(N, C, H, W)


# ---------------------------------------------------------------------------
# Pure-JAX reference mirroring the PyTorch forward.
# ---------------------------------------------------------------------------
def film_reference(x, lam, w1, b1, w2, b2):
    N, C, H, W = x.shape
    h = _leaky_relu(lam @ w1 + b1)
    out = h @ w2 + b2
    mu, sigma = out[:, :C], out[:, C:]
    mu, sigma = _leaky_relu(mu), _leaky_relu(sigma)
    return x * mu.reshape(N, C, 1, 1) + sigma.reshape(N, C, 1, 1)


if __name__ == "__main__":
    # Module hyper-params
    channels = 4
    in_channels = 3
    alpha = 1
    hidden = alpha * channels * 2   # 8
    out_dim = channels * 2          # 8

    key = jax.random.PRNGKey(0)
    kx, kl, k1, k2, k3, k4 = jax.random.split(key, 6)

    # Deterministic synthetic parameters (shapes match the nn.Linear layers).
    w1 = 0.1 * jax.random.normal(k1, (in_channels, hidden), dtype=jnp.float32)
    b1 = 0.1 * jax.random.normal(k2, (hidden,), dtype=jnp.float32)
    w2 = 0.1 * jax.random.normal(k3, (hidden, out_dim), dtype=jnp.float32)
    b2 = 0.1 * jax.random.normal(k4, (out_dim,), dtype=jnp.float32)

    # Case 1: 128-aligned spatial (H*W = 256).
    N, C, H, W = 2, channels, 16, 16
    x = jax.random.normal(kx, (N, C, H, W), dtype=jnp.float32)
    lam = jax.random.normal(kl, (N, in_channels), dtype=jnp.float32)
    y = jax.block_until_ready(film_layer(x, lam, w1, b1, w2, b2))
    y_ref = film_reference(x, lam, w1, b1, w2, b2)
    assert y.shape == (N, C, H, W)
    assert jnp.allclose(y, y_ref, atol=1e-5, rtol=1e-5)

    # Case 2: non-128-multiple spatial (H*W = 100) exercises lane padding.
    H2, W2 = 10, 10
    x2 = jax.random.normal(kx, (N, C, H2, W2), dtype=jnp.float32)
    y2 = jax.block_until_ready(film_layer(x2, lam, w1, b1, w2, b2))
    y2_ref = film_reference(x2, lam, w1, b1, w2, b2)
    assert y2.shape == (N, C, H2, W2)
    assert jnp.allclose(y2, y2_ref, atol=1e-5, rtol=1e-5)

    print("KERNEL_OK")
</pallas_src>

<mosaic_0001>
module attributes {stable_mosaic.version = 11 : i64} {
  func.func @film_kernel(%arg0: i32, %arg1: i32, %arg2: memref<8x256xf32, #tpu.memory_space<vmem>>, %arg3: memref<8x1xf32, #tpu.memory_space<vmem>>, %arg4: memref<8x1xf32, #tpu.memory_space<vmem>>, %arg5: memref<8x256xf32, #tpu.memory_space<vmem>>) attributes {dimension_semantics = [#tpu.dimension_semantics<parallel>, #tpu.dimension_semantics<parallel>], iteration_bounds = array<i64: 1, 1>, scalar_prefetch = 0 : i64, scratch_operands = 0 : i64, tpu.core_type = #tpu.core_type<tc>, window_params = [{transform_indices = @transform_0, window_bounds = array<i64: 8, 256>}, {transform_indices = @transform_1, window_bounds = array<i64: 8, 1>}, {transform_indices = @transform_2, window_bounds = array<i64: 8, 1>}, {transform_indices = @transform_3, window_bounds = array<i64: 8, 256>}]} {
    %c0 = arith.constant 0 : index
    %c0_0 = arith.constant 0 : index
    %0 = vector.load %arg2[%c0, %c0_0] : memref<8x256xf32, #tpu.memory_space<vmem>>, vector<8x256xf32>
    %c0_1 = arith.constant 0 : index
    %c0_2 = arith.constant 0 : index
    %1 = vector.load %arg3[%c0_1, %c0_2] : memref<8x1xf32, #tpu.memory_space<vmem>>, vector<8x1xf32>
    %2 = vector.broadcast %1 : vector<8x1xf32> to vector<8x256xf32>
    %3 = arith.mulf %0, %2 : vector<8x256xf32>
    %c0_3 = arith.constant 0 : index
    %c0_4 = arith.constant 0 : index
    %4 = vector.load %arg4[%c0_3, %c0_4] : memref<8x1xf32, #tpu.memory_space<vmem>>, vector<8x1xf32>
    %5 = vector.broadcast %4 : vector<8x1xf32> to vector<8x256xf32>
    %6 = arith.addf %3, %5 : vector<8x256xf32>
    %c0_5 = arith.constant 0 : index
    %c0_6 = arith.constant 0 : index
    %7 = vector.load %arg5[%c0_5, %c0_6] : memref<8x256xf32, #tpu.memory_space<vmem>>, vector<8x256xf32>
    tpu.vector_store %arg5[%c0_5, %c0_6], %6 {strides = array<i32>} : memref<8x256xf32, #tpu.memory_space<vmem>>, vector<8x256xf32>,
    return
  }
  func.func @transform_0(%arg0: i32, %arg1: i32) -> (i32, i32) {
    %c0_i32 = arith.constant 0 : i32
    return %arg0, %arg1 : i32, i32
  }
  func.func @transform_1(%arg0: i32, %arg1: i32) -> (i32, i32) {
    %c0_i32 = arith.constant 0 : i32
    %c0_i32_0 = arith.constant 0 : i32
    return %arg0, %c0_i32 : i32, i32
  }
  func.func @transform_2(%arg0: i32, %arg1: i32) -> (i32, i32) {
    %c0_i32 = arith.constant 0 : i32
    %c0_i32_0 = arith.constant 0 : i32
    return %arg0, %c0_i32 : i32, i32
  }
  func.func @transform_3(%arg0: i32, %arg1: i32) -> (i32, i32) {
    %c0_i32 = arith.constant 0 : i32
    return %arg0, %arg1 : i32, i32
  }
}

</mosaic_0001>

<llo_original>
// kernel: tpu_custom_call.1
$region0: #{tpu_custom_call.1}
  #allocation0 [shape = 'u32[]', space=smem, size = 0x4, offset = 0x4, fixed_abs, tag = 'smem constant byte address 0x4 - core index']
  #allocation1 [shape = 'u32[72,128]{1,0:T(1,128)}', space=vmem, size = 0x9000, scoped, tag = 'internal scratch']
  %s0 = inlined_call_operand.vmem [shape: f32[8,256], index: 0, kind: input, shape index: {}]
  %s1 = inlined_call_operand.vmem [shape: f32[8,1], index: 1, kind: input, shape index: {}]
  %s2 = inlined_call_operand.vmem [shape: f32[8,1], index: 2, kind: input, shape index: {}]
  %s3 = inlined_call_operand.hbm [shape: f32[8,256], index: 3, kind: output, shape index: {}]
  %s4 = sld [smem:[#allocation0]]
  $region22: #{tpu_custom_call.1} parent=0
    _
  %s6 = ssub.s32 1, %s4
  %s7 = scalar_select 0, %s6, %s4
  $region1: #{tpu_custom_call.1} parent=0
    #allocation2 [shape = 'u8[8192]{0}', space=vmem, size = 0x2000, scoped, tag = 'output window, operand 0, single buffered']
    #allocation3 [shape = 's32[1]{0}', space=sflag, size = 0x4, scoped, tag = 'scoped memory for tpu_custom_call.1']
    %8 = vsyncpa [#allocation3], 0
    // Predicated region
    $region2: #{tpu_custom_call.1} parent=1 // pred_check
      _
    $region3: #{tpu_custom_call.1} parent=1 // pred_check_branch
      %10 = sbr.rel (0) target = $region5
    $region4: #{tpu_custom_call.1} parent=1 // pred_region
      _
    $region5: #{tpu_custom_call.1} parent=1 // pred_fallthru
      _
    // Predicated region
    $region6: #{tpu_custom_call.1} parent=1 // pred_check
      _
    $region7: #{tpu_custom_call.1} parent=1 // pred_check_branch
      %12 = sbr.rel (0) target = $region9
    $region8: #{tpu_custom_call.1} parent=1 // pred_region
      _
    $region9: #{tpu_custom_call.1} parent=1 // pred_fallthru
      _
    // Predicated region
    $region10: #{tpu_custom_call.1} parent=1 // pred_check
      _
    $region11: #{tpu_custom_call.1} parent=1 // pred_check_branch
      %14 = sbr.rel (0) target = $region13
    $region12: #{tpu_custom_call.1} parent=1 // pred_region
      _
    $region13: #{tpu_custom_call.1} parent=1 // pred_fallthru
      _
    %v15 = vld [vmem:[%s0] sm:$0xff]
    %v16 = vld [vmem:[%s0 + $0x8] sm:$0xff]
    %v17 = vld [vmem:[%s1] sm:$0xff]
    %19 = vset.pattern.permute.xlu0 0
    %20 = vperm.xlu0 %19, %v17
    %v21 = vpop.permute.xlu0 %20
    %v23 = vmul.f32 %v15, %v21
    %v24 = vmul.f32 %v16, %v21
    %v25 = vld [vmem:[%s2] sm:$0xff]
    %27 = vset.pattern.permute.xlu0 0
    %28 = vperm.xlu0 %27, %v25
    %v29 = vpop.permute.xlu0 %28
    %v31 = vadd.f32 %v23, %v29
    %v32 = vadd.f32 %v24, %v29
    %33 = vst [vmem:[#allocation2] sm:$0xff] %v31
    %34 = vst [vmem:[#allocation2 + $0x8] sm:$0xff] %v32
    // Predicated region
    $region14: #{tpu_custom_call.1} parent=1 // pred_check
      _
    $region15: #{tpu_custom_call.1} parent=1 // pred_check_branch
      %36 = sbr.rel (0) target = $region17
    $region16: #{tpu_custom_call.1} parent=1 // pred_region
      %38 = vsyncadd [#allocation3], 0
      %s40 = sshll.u32 [#allocation2], 4
      %s41 = int_to_ptr.vmem [resolvable:$true] %s40
      %s42 = sshll.u32 %s3, 4
      %s43 = int_to_ptr.hbm [resolvable:$true] %s42
      %45 = dma.vmem_to_hbm [thread:$0]  %s41, 256, %s43, [#allocation3]
    $region17: #{tpu_custom_call.1} parent=1 // pred_fallthru
      _
    // Predicated region
    $region18: #{tpu_custom_call.1} parent=1 // pred_check
      _
    $region19: #{tpu_custom_call.1} parent=1 // pred_check_branch
      %47 = sbr.rel (0) target = $region21
    $region20: #{tpu_custom_call.1} parent=1 // pred_region
      %49 = dma.done [#allocation3], 256
    $region21: #{tpu_custom_call.1} parent=1 // pred_fallthru
      _
    %50 = vsyncpa [#allocation3], 1

</llo_original>
